<compile_context>
chip_gen: v7x
topology: tpu7x:2x2x1
jax: 0.10.0
libtpu: 0.0.40
codegen_flags: <defaults>
</compile_context>

<pallas_src>
import functools

import jax
import jax.numpy as jnp
from jax.experimental import pallas as pl
from jax.experimental.pallas import tpu as pltpu


def _round_up(x, m):
    return (x + m - 1) // m * m


def _down_wt_kernel(x_ref, w_ref, bias_ref, o_ref):
    """Pure matmul + bias + ReLU.

    The Haar space-to-depth band combination and the BatchNorm scale are folded
    into w_ref / bias_ref by the wrapper, so the MXU does essentially all the
    work and the VPU epilogue is one add + one max per output element.
    """
    y = jnp.dot(x_ref[...], w_ref[...], preferred_element_type=jnp.float32)
    o_ref[...] = jnp.maximum(y + bias_ref[...], 0.0).astype(o_ref.dtype)


@functools.partial(jax.jit, static_argnames=("eps",))
def down_wt(x_nchw, conv_w, conv_b, gamma, beta, run_mean, run_var, eps=1e-5):
    """x_nchw: (N, C, H, W) float32. Returns (N, out_ch, H//2, W//2) float32."""
    N, C, H, W = x_nchw.shape
    out_ch = conv_w.shape[0]
    assert H % 2 == 0 and W % 2 == 0

    Ho, Wo = H // 2, W // 2
    rows = N * Ho * Wo
    c4 = 4 * C

    # --- single layout pass: NCHW -> space-to-depth rows (rows, 4C), order [a|b|c|d]
    #     (a=x[2i,2j], b=x[2i,2j+1], c=x[2i+1,2j], d=x[2i+1,2j+1])
    x = x_nchw.reshape(N, C, Ho, 2, Wo, 2)
    x = jnp.transpose(x, (0, 2, 4, 3, 5, 1))                  # (N, Ho, Wo, 2, 2, C)
    x = x.reshape(rows, c4).astype(jnp.float32)

    # --- fold Haar bands + BN scale into the conv weight (wrapper-side, tiny)
    # coef[pos, band]: pos in (a,b,c,d), band in (LL, h0, h1, h2)
    #   LL = (a+b+c+d)/2, h0 = (a+b-c-d)/2, h1 = (a-b+c-d)/2, h2 = (a-b-c+d)/2
    coef = 0.5 * jnp.array(
        [[1.0,  1.0,  1.0,  1.0],
         [1.0,  1.0, -1.0, -1.0],
         [1.0, -1.0,  1.0, -1.0],
         [1.0, -1.0, -1.0,  1.0]], dtype=jnp.float32)
    haar = jnp.kron(coef, jnp.eye(C, dtype=jnp.float32))      # (4C, 4C): [a|b|c|d] -> [LL|h0|h1|h2]
    # TODO(synk): band ordering/sign only validated against the in-file JAX reference,
    # not against pytorch_wavelets DWTForward (HL/LH order + high-pass sign conventions).
    w = conv_w.reshape(out_ch, c4).T.astype(jnp.float32)      # (4C, out_ch), rows in band order
    scale = (gamma / jnp.sqrt(run_var + eps)).astype(jnp.float32)
    bias = ((conv_b - run_mean) * scale + beta).astype(jnp.float32)
    w_folded = (haar @ w) * scale[None, :]                    # (4C, out_ch)

    # --- lane-dense output: pad out_ch to a multiple of 128 (unmasked stores)
    out_ch_p = _round_up(max(out_ch, 128), 128)
    w_p = jnp.pad(w_folded, ((0, 0), (0, out_ch_p - out_ch)))
    bias_p = jnp.pad(bias, (0, out_ch_p - out_ch)).reshape(1, out_ch_p)

    # --- row tiling: large MXU-aligned tiles, pad rows to a multiple of TR
    TR = min(2048, _round_up(rows, 256))                      # multiple of 256 (and of 128)
    rows_p = _round_up(rows, TR)
    if rows_p != rows:
        x = jnp.pad(x, ((0, rows_p - rows), (0, 0)))
    grid = (rows_p // TR,)

    out = pl.pallas_call(
        _down_wt_kernel,
        out_shape=jax.ShapeDtypeStruct((rows_p, out_ch_p), jnp.float32),
        grid_spec=pltpu.PrefetchScalarGridSpec(
            num_scalar_prefetch=0,
            grid=grid,
            in_specs=[
                pl.BlockSpec((TR, c4), lambda i: (i, 0)),
                pl.BlockSpec((c4, out_ch_p), lambda i: (0, 0)),
                pl.BlockSpec((1, out_ch_p), lambda i: (0, 0)),
            ],
            out_specs=pl.BlockSpec((TR, out_ch_p), lambda i: (i, 0)),
        ),
        compiler_params=pltpu.CompilerParams(
            dimension_semantics=("parallel",)),
    )(x, w_p, bias_p)

    # --- slice off padding, rows -> NCHW
    out = out[:rows, :out_ch].reshape(N, Ho, Wo, out_ch)
    return jnp.transpose(out, (0, 3, 1, 2))


def _reference(x_nchw, conv_w, conv_b, gamma, beta, run_mean, run_var, eps=1e-5):
    """Pure-JAX reference of the same math (for validation only)."""
    N, C, H, W = x_nchw.shape
    out_ch = conv_w.shape[0]
    a = x_nchw[:, :, 0::2, 0::2]
    b = x_nchw[:, :, 0::2, 1::2]
    c = x_nchw[:, :, 1::2, 0::2]
    d = x_nchw[:, :, 1::2, 1::2]
    ll = (a + b + c + d) * 0.5
    h0 = (a + b - c - d) * 0.5
    h1 = (a - b + c - d) * 0.5
    h2 = (a - b - c + d) * 0.5
    feats = jnp.concatenate([ll, h0, h1, h2], axis=1)              # (N, 4C, H/2, W/2)
    w = conv_w.reshape(out_ch, 4 * C)
    y = jnp.einsum('oc,nchw->nohw', w, feats) + conv_b[None, :, None, None]
    scale = gamma / jnp.sqrt(run_var + eps)
    y = (y - run_mean[None, :, None, None]) * scale[None, :, None, None] + beta[None, :, None, None]
    return jnp.maximum(y, 0.0)


if __name__ == "__main__":
    # small shapes consistent with the module: batch=2, in_ch=4, spatial=16, out_ch=8
    N, in_ch, H, W = 2, 4, 16, 16
    out_ch = 8

    key = jax.random.PRNGKey(0)
    kx, kw, kb = jax.random.split(key, 3)
    x = jax.random.normal(kx, (N, in_ch, H, W), dtype=jnp.float32)

    # deterministic synthetic parameters (eval-mode BN with running stats)
    conv_w = 0.1 * jax.random.normal(kw, (out_ch, in_ch * 4, 1, 1), dtype=jnp.float32)
    conv_b = 0.1 * jax.random.normal(kb, (out_ch,), dtype=jnp.float32)
    gamma = jnp.ones((out_ch,), jnp.float32)
    beta = jnp.zeros((out_ch,), jnp.float32)
    run_mean = jnp.zeros((out_ch,), jnp.float32)
    run_var = jnp.ones((out_ch,), jnp.float32)

    y = down_wt(x, conv_w, conv_b, gamma, beta, run_mean, run_var)
    y = jax.block_until_ready(y)

    y_ref = _reference(x, conv_w, conv_b, gamma, beta, run_mean, run_var)
    assert y.shape == (N, out_ch, H // 2, W // 2)
    assert jnp.allclose(y, y_ref, atol=1e-5, rtol=1e-5)

    print("KERNEL_OK")
</pallas_src>

<mosaic_0001>
module attributes {stable_mosaic.version = 11 : i64} {
  func.func @_down_wt_kernel(%arg0: i32, %arg1: memref<256x16xf32, #tpu.memory_space<vmem>>, %arg2: memref<16x128xf32, #tpu.memory_space<vmem>>, %arg3: memref<1x128xf32, #tpu.memory_space<vmem>>, %arg4: memref<256x128xf32, #tpu.memory_space<vmem>>) attributes {dimension_semantics = [#tpu.dimension_semantics<parallel>], iteration_bounds = array<i64: 1>, scalar_prefetch = 0 : i64, scratch_operands = 0 : i64, tpu.core_type = #tpu.core_type<tc>, window_params = [{transform_indices = @transform_0, window_bounds = array<i64: 256, 16>}, {pipeline_mode = #tpu.pipeline_mode<synchronous>, transform_indices = @transform_1, window_bounds = array<i64: 16, 128>}, {pipeline_mode = #tpu.pipeline_mode<synchronous>, transform_indices = @transform_2, window_bounds = array<i64: 1, 128>}, {transform_indices = @transform_3, window_bounds = array<i64: 256, 128>}]} {
    %c0 = arith.constant 0 : index
    %c0_0 = arith.constant 0 : index
    %0 = vector.load %arg1[%c0, %c0_0] : memref<256x16xf32, #tpu.memory_space<vmem>>, vector<256x16xf32>
    %c0_1 = arith.constant 0 : index
    %c0_2 = arith.constant 0 : index
    %1 = vector.load %arg2[%c0_1, %c0_2] : memref<16x128xf32, #tpu.memory_space<vmem>>, vector<16x128xf32>
    %cst = arith.constant dense<0.000000e+00> : vector<256x128xf32>
    %2 = tpu.matmul %0, %1, %cst {dimension_numbers = #tpu.dot_dimension_numbers<[1], [0], [0], [1], [0, 0, 1, 1], [], []>} : vector<256x16xf32>, vector<16x128xf32>, vector<256x128xf32> -> vector<256x128xf32>
    %c0_3 = arith.constant 0 : index
    %c0_4 = arith.constant 0 : index
    %3 = vector.load %arg3[%c0_3, %c0_4] : memref<1x128xf32, #tpu.memory_space<vmem>>, vector<1x128xf32>
    %4 = vector.broadcast %3 : vector<1x128xf32> to vector<256x128xf32>
    %5 = arith.addf %2, %4 : vector<256x128xf32>
    %cst_5 = arith.constant 0.000000e+00 : f32
    %6 = vector.broadcast %cst_5 : f32 to vector<256x128xf32>
    %7 = arith.maximumf %5, %6 : vector<256x128xf32>
    %c0_6 = arith.constant 0 : index
    %c0_7 = arith.constant 0 : index
    %8 = vector.load %arg4[%c0_6, %c0_7] : memref<256x128xf32, #tpu.memory_space<vmem>>, vector<256x128xf32>
    tpu.vector_store %arg4[%c0_6, %c0_7], %7 {strides = array<i32>} : memref<256x128xf32, #tpu.memory_space<vmem>>, vector<256x128xf32>,
    return
  }
  func.func @transform_0(%arg0: i32) -> (i32, i32) {
    %c0_i32 = arith.constant 0 : i32
    %c0_i32_0 = arith.constant 0 : i32
    return %arg0, %c0_i32 : i32, i32
  }
  func.func @transform_1(%arg0: i32) -> (i32, i32) {
    %c0_i32 = arith.constant 0 : i32
    %c0_i32_0 = arith.constant 0 : i32
    %c0_i32_1 = arith.constant 0 : i32
    return %c0_i32, %c0_i32_0 : i32, i32
  }
  func.func @transform_2(%arg0: i32) -> (i32, i32) {
    %c0_i32 = arith.constant 0 : i32
    %c0_i32_0 = arith.constant 0 : i32
    %c0_i32_1 = arith.constant 0 : i32
    return %c0_i32, %c0_i32_0 : i32, i32
  }
  func.func @transform_3(%arg0: i32) -> (i32, i32) {
    %c0_i32 = arith.constant 0 : i32
    %c0_i32_0 = arith.constant 0 : i32
    return %arg0, %c0_i32 : i32, i32
  }
}

</mosaic_0001>

<llo_original>
// kernel: down_wt.1
$region0: #{down_wt.1}
  #allocation0 [shape = 'u32[]', space=smem, size = 0x4, offset = 0x4, fixed_abs, tag = 'smem constant byte address 0x4 - core index']
  #allocation1 [shape = 'u32[144,128]{1,0:T(1,128)}', space=vmem, size = 0x12000, scoped, tag = 'internal scratch']
  %s0 = inlined_call_operand.vmem [shape: f32[256,16], index: 0, kind: input, shape index: {}]
  %s1 = inlined_call_operand.vmem [shape: f32[16,128], index: 1, kind: input, shape index: {}]
  %s2 = inlined_call_operand.vmem [shape: f32[1,128], index: 2, kind: input, shape index: {}]
  %s3 = inlined_call_operand.vmem [shape: f32[256,128], index: 3, kind: output, shape index: {}]
  %s4 = sld [smem:[#allocation0]]
  $region22: #{down_wt.1} parent=0
    _
  %s6 = ssub.s32 1, %s4
  %s7 = scalar_select 0, %s6, %s4
  // Predicated region
  $region2: #{down_wt.1} parent=0 // pred_check
    _
  $region3: #{down_wt.1} parent=0 // pred_check_branch
    %9 = sbr.rel (0) target = $region5
  $region4: #{down_wt.1} parent=0 // pred_region
    _
  $region5: #{down_wt.1} parent=0 // pred_fallthru
    _
  // Predicated region
  $region6: #{down_wt.1} parent=0 // pred_check
    _
  $region7: #{down_wt.1} parent=0 // pred_check_branch
    %11 = sbr.rel (0) target = $region9
  $region8: #{down_wt.1} parent=0 // pred_region
    _
  $region9: #{down_wt.1} parent=0 // pred_fallthru
    _
  // Predicated region
  $region10: #{down_wt.1} parent=0 // pred_check
    _
  $region11: #{down_wt.1} parent=0 // pred_check_branch
    %13 = sbr.rel (0) target = $region13
  $region12: #{down_wt.1} parent=0 // pred_region
    _
  $region13: #{down_wt.1} parent=0 // pred_fallthru
    _
  %v14 = vld [vmem:[%s0] sm:$0xff]
  %v15 = vld [vmem:[%s0 + $0x8] sm:$0xff]
  %v16 = vld [vmem:[%s0 + $0x10] sm:$0xff]
  %v17 = vld [vmem:[%s0 + $0x18] sm:$0xff]
  %v18 = vld [vmem:[%s0 + $0x20] sm:$0xff]
  %v19 = vld [vmem:[%s0 + $0x28] sm:$0xff]
  %v20 = vld [vmem:[%s0 + $0x30] sm:$0xff]
  %v21 = vld [vmem:[%s0 + $0x38] sm:$0xff]
  %v22 = vld [vmem:[%s0 + $0x40] sm:$0xff]
  %v23 = vld [vmem:[%s0 + $0x48] sm:$0xff]
  %v24 = vld [vmem:[%s0 + $0x50] sm:$0xff]
  %v25 = vld [vmem:[%s0 + $0x58] sm:$0xff]
  %v26 = vld [vmem:[%s0 + $0x60] sm:$0xff]
  %v27 = vld [vmem:[%s0 + $0x68] sm:$0xff]
  %v28 = vld [vmem:[%s0 + $0x70] sm:$0xff]
  %v29 = vld [vmem:[%s0 + $0x78] sm:$0xff]
  %v30 = vld [vmem:[%s0 + $0x80] sm:$0xff]
  %v31 = vld [vmem:[%s0 + $0x88] sm:$0xff]
  %v32 = vld [vmem:[%s0 + $0x90] sm:$0xff]
  %v33 = vld [vmem:[%s0 + $0x98] sm:$0xff]
  %v34 = vld [vmem:[%s0 + $0xa0] sm:$0xff]
  %v35 = vld [vmem:[%s0 + $0xa8] sm:$0xff]
  %v36 = vld [vmem:[%s0 + $0xb0] sm:$0xff]
  %v37 = vld [vmem:[%s0 + $0xb8] sm:$0xff]
  %v38 = vld [vmem:[%s0 + $0xc0] sm:$0xff]
  %v39 = vld [vmem:[%s0 + $0xc8] sm:$0xff]
  %v40 = vld [vmem:[%s0 + $0xd0] sm:$0xff]
  %v41 = vld [vmem:[%s0 + $0xd8] sm:$0xff]
  %v42 = vld [vmem:[%s0 + $0xe0] sm:$0xff]
  %v43 = vld [vmem:[%s0 + $0xe8] sm:$0xff]
  %v44 = vld [vmem:[%s0 + $0xf0] sm:$0xff]
  %v45 = vld [vmem:[%s0 + $0xf8] sm:$0xff]
  %v46 = vld [vmem:[%s1] sm:$0xff]
  %v47 = vld [vmem:[%s1 + $0x8] sm:$0xff]
  %v48 = vld [vmem:[%s2] sm:$0x1]
  %v50 = vlaneseq
  %v51 = vshrl.u32 %v50, 7
  %v52 = vsub.s32 0, %v51
  %v53 = vrot.slane %v48, %v52
  %vm55 = vcmask 130048
  %v57 = vsel %vm55, %v14, 0
  %v60 = vsel %vm55, %v15, 0
  %v63 = vsel %vm55, %v16, 0
  %v66 = vsel %vm55, %v17, 0
  %v69 = vsel %vm55, %v18, 0
  %v72 = vsel %vm55, %v19, 0
  %v75 = vsel %vm55, %v20, 0
  %v78 = vsel %vm55, %v21, 0
  %v81 = vsel %vm55, %v22, 0
  %v84 = vsel %vm55, %v23, 0
  %v87 = vsel %vm55, %v24, 0
  %v90 = vsel %vm55, %v25, 0
  %v93 = vsel %vm55, %v26, 0
  %v96 = vsel %vm55, %v27, 0
  %v99 = vsel %vm55, %v28, 0
  %v102 = vsel %vm55, %v29, 0
  %v105 = vsel %vm55, %v30, 0
  %v108 = vsel %vm55, %v31, 0
  %v111 = vsel %vm55, %v32, 0
  %v114 = vsel %vm55, %v33, 0
  %v117 = vsel %vm55, %v34, 0
  %v120 = vsel %vm55, %v35, 0
  %v123 = vsel %vm55, %v36, 0
  %v126 = vsel %vm55, %v37, 0
  %v129 = vsel %vm55, %v38, 0
  %v132 = vsel %vm55, %v39, 0
  %v135 = vsel %vm55, %v40, 0
  %v138 = vsel %vm55, %v41, 0
  %v141 = vsel %vm55, %v42, 0
  %v144 = vsel %vm55, %v43, 0
  %v147 = vsel %vm55, %v44, 0
  %v150 = vsel %vm55, %v45, 0
  %152 = vmatprep.subr.mxu0 0.0
  %153 = vmatpush1.msra.mxu0 %v46
  %154 = vmatprep.subr.mxu0 0.0
  %155 = vmatpush1.msra.mxu0 %v47
  %156 = vmatprep.subr.mxu0 0.0
  %157 = vmatpush1.msra.mxu0 0.0
  %158 = vmatprep.subr.mxu0 0.0
  %159 = vmatpush1.msra.mxu0 0.0
  %160 = vmatprep.subr.mxu0 0.0
  %161 = vmatpush1.msra.mxu0 0.0
  %162 = vmatprep.subr.mxu0 0.0
  %163 = vmatpush1.msra.mxu0 0.0
  %164 = vmatprep.subr.mxu0 0.0
  %165 = vmatpush1.msra.mxu0 0.0
  %166 = vmatprep.subr.mxu0 0.0
  %167 = vmatpush1.msra.mxu0 0.0
  %168 = vmatprep.subr.mxu0 0.0
  %169 = vmatpush1.msra.mxu0 0.0
  %170 = vmatprep.subr.mxu0 0.0
  %171 = vmatpush1.msra.mxu0 0.0
  %172 = vmatprep.subr.mxu0 0.0
  %173 = vmatpush1.msra.mxu0 0.0
  %174 = vmatprep.subr.mxu0 0.0
  %175 = vmatpush1.msra.mxu0 0.0
  %176 = vmatprep.subr.mxu0 0.0
  %177 = vmatpush1.msra.mxu0 0.0
  %178 = vmatprep.subr.mxu0 0.0
  %179 = vmatpush1.msra.mxu0 0.0
  %180 = vmatprep.subr.mxu0 0.0
  %181 = vmatpush1.msra.mxu0 0.0
  %182 = vmatprep.subr.mxu0 0.0
  %183 = vmatpush1.msra.mxu0 0.0
  %184 = vmatprep.subr.mxu0 0.0
  %185 = vmatpush1.msra.mxu0 0.0
  %186 = vmatprep.subr.mxu0 0.0
  %187 = vmatpush1.msra.mxu0 0.0
  %188 = vmatprep.subr.mxu0 0.0
  %189 = vmatpush1.msra.mxu0 0.0
  %190 = vmatprep.subr.mxu0 0.0
  %191 = vmatpush1.msra.mxu0 0.0
  %192 = vmatprep.subr.mxu0 0.0
  %193 = vmatpush1.msra.mxu0 0.0
  %194 = vmatprep.subr.mxu0 0.0
  %195 = vmatpush1.msra.mxu0 0.0
  %196 = vmatprep.subr.mxu0 0.0
  %197 = vmatpush1.msra.mxu0 0.0
  %198 = vmatprep.subr.mxu0 0.0
  %199 = vmatpush1.msra.mxu0 0.0
  %200 = vmatprep.subr.mxu0 0.0
  %201 = vmatpush1.msra.mxu0 0.0
  %202 = vmatprep.subr.mxu0 0.0
  %203 = vmatpush1.msra.mxu0 0.0
  %204 = vmatprep.subr.mxu0 0.0
  %205 = vmatpush1.msra.mxu0 0.0
  %206 = vmatprep.subr.mxu0 0.0
  %207 = vmatpush1.msra.mxu0 0.0
  %208 = vmatprep.subr.mxu0 0.0
  %209 = vmatpush1.msra.mxu0 0.0
  %210 = vmatprep.subr.mxu0 0.0
  %211 = vmatpush1.msra.mxu0 0.0
  %212 = vmatprep.subr.mxu0 0.0
  %213 = vmatpush1.msra.mxu0 0.0
  %214 = vmatprep.subr.mxu0 0.0
  %215 = vmatpush1.msra.mxu0 0.0
  %216 = vmatprep.mubr.f32.mxu0 0.0
  %217 = vmatmul.mubr.f32.gmra.mrb[0].mxu0 %v57
  %v218 = vpop.f32.mrb[0].mxu0
  %v219 = vadd.f32 %v53, %v218
  %v220 = vpop.f32.mrb[0].mxu0
  %221 = vmatprep.mubr.f32.mxu0 0.0
  %222 = vmatmul.mubr.f32.gmra.mrb[0].mxu0 %v60
  %v223 = vpop.f32.mrb[0].mxu0
  %v224 = vadd.f32 %v53, %v223
  %v225 = vpop.f32.mrb[0].mxu0
  %226 = vmatprep.mubr.f32.mxu0 0.0
  %227 = vmatmul.mubr.f32.gmra.mrb[0].mxu0 %v63
  %v228 = vpop.f32.mrb[0].mxu0
  %v229 = vadd.f32 %v53, %v228
  %v230 = vpop.f32.mrb[0].mxu0
  %231 = vmatprep.mubr.f32.mxu0 0.0
  %232 = vmatmul.mubr.f32.gmra.mrb[0].mxu0 %v66
  %v233 = vpop.f32.mrb[0].mxu0
  %v234 = vadd.f32 %v53, %v233
  %v235 = vpop.f32.mrb[0].mxu0
  %236 = vmatprep.mubr.f32.mxu0 0.0
  %237 = vmatmul.mubr.f32.gmra.mrb[0].mxu0 %v69
  %v238 = vpop.f32.mrb[0].mxu0
  %v239 = vadd.f32 %v53, %v238
  %v240 = vpop.f32.mrb[0].mxu0
  %241 = vmatprep.mubr.f32.mxu0 0.0
  %242 = vmatmul.mubr.f32.gmra.mrb[0].mxu0 %v72
  %v243 = vpop.f32.mrb[0].mxu0
  %v244 = vadd.f32 %v53, %v243
  %v245 = vpop.f32.mrb[0].mxu0
  %246 = vmatprep.mubr.f32.mxu0 0.0
  %247 = vmatmul.mubr.f32.gmra.mrb[0].mxu0 %v75
  %v248 = vpop.f32.mrb[0].mxu0
  %v249 = vadd.f32 %v53, %v248
  %v250 = vpop.f32.mrb[0].mxu0
  %251 = vmatprep.mubr.f32.mxu0 0.0
  %252 = vmatmul.mubr.f32.gmra.mrb[0].mxu0 %v78
  %v253 = vpop.f32.mrb[0].mxu0
  %v254 = vadd.f32 %v53, %v253
  %v255 = vpop.f32.mrb[0].mxu0
  %256 = vmatprep.mubr.f32.mxu0 0.0
  %257 = vmatmul.mubr.f32.gmra.mrb[0].mxu0 %v81
  %v258 = vpop.f32.mrb[0].mxu0
  %v259 = vadd.f32 %v53, %v258
  %v260 = vpop.f32.mrb[0].mxu0
  %261 = vmatprep.mubr.f32.mxu0 0.0
  %262 = vmatmul.mubr.f32.gmra.mrb[0].mxu0 %v84
  %v263 = vpop.f32.mrb[0].mxu0
  %v264 = vadd.f32 %v53, %v263
  %v265 = vpop.f32.mrb[0].mxu0
  %266 = vmatprep.mubr.f32.mxu0 0.0
  %267 = vmatmul.mubr.f32.gmra.mrb[0].mxu0 %v87
  %v268 = vpop.f32.mrb[0].mxu0
  %v269 = vadd.f32 %v53, %v268
  %v270 = vpop.f32.mrb[0].mxu0
  %271 = vmatprep.mubr.f32.mxu0 0.0
  %272 = vmatmul.mubr.f32.gmra.mrb[0].mxu0 %v90
  %v273 = vpop.f32.mrb[0].mxu0
  %v274 = vadd.f32 %v53, %v273
  %v275 = vpop.f32.mrb[0].mxu0
  %276 = vmatprep.mubr.f32.mxu0 0.0
  %277 = vmatmul.mubr.f32.gmra.mrb[0].mxu0 %v93
  %v278 = vpop.f32.mrb[0].mxu0
  %v279 = vadd.f32 %v53, %v278
  %v280 = vpop.f32.mrb[0].mxu0
  %281 = vmatprep.mubr.f32.mxu0 0.0
  %282 = vmatmul.mubr.f32.gmra.mrb[0].mxu0 %v96
  %v283 = vpop.f32.mrb[0].mxu0
  %v284 = vadd.f32 %v53, %v283
  %v285 = vpop.f32.mrb[0].mxu0
  %286 = vmatprep.mubr.f32.mxu0 0.0
  %287 = vmatmul.mubr.f32.gmra.mrb[0].mxu0 %v99
  %v288 = vpop.f32.mrb[0].mxu0
  %v289 = vadd.f32 %v53, %v288
  %v290 = vpop.f32.mrb[0].mxu0
  %291 = vmatprep.mubr.f32.mxu0 0.0
  %292 = vmatmul.mubr.f32.gmra.mrb[0].mxu0 %v102
  %v293 = vpop.f32.mrb[0].mxu0
  %v294 = vadd.f32 %v53, %v293
  %v295 = vpop.f32.mrb[0].mxu0
  %296 = vmatprep.mubr.f32.mxu0 0.0
  %297 = vmatmul.mubr.f32.gmra.mrb[0].mxu0 %v105
  %v298 = vpop.f32.mrb[0].mxu0
  %v299 = vadd.f32 %v53, %v298
  %v300 = vpop.f32.mrb[0].mxu0
  %301 = vmatprep.mubr.f32.mxu0 0.0
  %302 = vmatmul.mubr.f32.gmra.mrb[0].mxu0 %v108
  %v303 = vpop.f32.mrb[0].mxu0
  %v304 = vadd.f32 %v53, %v303
  %v305 = vpop.f32.mrb[0].mxu0
  %306 = vmatprep.mubr.f32.mxu0 0.0
  %307 = vmatmul.mubr.f32.gmra.mrb[0].mxu0 %v111
  %v308 = vpop.f32.mrb[0].mxu0
  %v309 = vadd.f32 %v53, %v308
  %v310 = vpop.f32.mrb[0].mxu0
  %311 = vmatprep.mubr.f32.mxu0 0.0
  %312 = vmatmul.mubr.f32.gmra.mrb[0].mxu0 %v114
  %v313 = vpop.f32.mrb[0].mxu0
  %v314 = vadd.f32 %v53, %v313
  %v315 = vpop.f32.mrb[0].mxu0
  %316 = vmatprep.mubr.f32.mxu0 0.0
  %317 = vmatmul.mubr.f32.gmra.mrb[0].mxu0 %v117
  %v318 = vpop.f32.mrb[0].mxu0
  %v319 = vadd.f32 %v53, %v318
  %v320 = vpop.f32.mrb[0].mxu0
  %321 = vmatprep.mubr.f32.mxu0 0.0
  %322 = vmatmul.mubr.f32.gmra.mrb[0].mxu0 %v120
  %v323 = vpop.f32.mrb[0].mxu0
  %v324 = vadd.f32 %v53, %v323
  %v325 = vpop.f32.mrb[0].mxu0
  %326 = vmatprep.mubr.f32.mxu0 0.0
  %327 = vmatmul.mubr.f32.gmra.mrb[0].mxu0 %v123
  %v328 = vpop.f32.mrb[0].mxu0
  %v329 = vadd.f32 %v53, %v328
  %v330 = vpop.f32.mrb[0].mxu0
  %331 = vmatprep.mubr.f32.mxu0 0.0
  %332 = vmatmul.mubr.f32.gmra.mrb[0].mxu0 %v126
  %v333 = vpop.f32.mrb[0].mxu0
  %v334 = vadd.f32 %v53, %v333
  %v335 = vpop.f32.mrb[0].mxu0
  %336 = vmatprep.mubr.f32.mxu0 0.0
  %337 = vmatmul.mubr.f32.gmra.mrb[0].mxu0 %v129
  %v338 = vpop.f32.mrb[0].mxu0
  %v339 = vadd.f32 %v53, %v338
  %v340 = vpop.f32.mrb[0].mxu0
  %341 = vmatprep.mubr.f32.mxu0 0.0
  %342 = vmatmul.mubr.f32.gmra.mrb[0].mxu0 %v132
  %v343 = vpop.f32.mrb[0].mxu0
  %v344 = vadd.f32 %v53, %v343
  %v345 = vpop.f32.mrb[0].mxu0
  %346 = vmatprep.mubr.f32.mxu0 0.0
  %347 = vmatmul.mubr.f32.gmra.mrb[0].mxu0 %v135
  %v348 = vpop.f32.mrb[0].mxu0
  %v349 = vadd.f32 %v53, %v348
  %v350 = vpop.f32.mrb[0].mxu0
  %351 = vmatprep.mubr.f32.mxu0 0.0
  %352 = vmatmul.mubr.f32.gmra.mrb[0].mxu0 %v138
  %v353 = vpop.f32.mrb[0].mxu0
  %v354 = vadd.f32 %v53, %v353
  %v355 = vpop.f32.mrb[0].mxu0
  %356 = vmatprep.mubr.f32.mxu0 0.0
  %357 = vmatmul.mubr.f32.gmra.mrb[0].mxu0 %v141
  %v358 = vpop.f32.mrb[0].mxu0
  %v359 = vadd.f32 %v53, %v358
  %v360 = vpop.f32.mrb[0].mxu0
  %361 = vmatprep.mubr.f32.mxu0 0.0
  %362 = vmatmul.mubr.f32.gmra.mrb[0].mxu0 %v144
  %v363 = vpop.f32.mrb[0].mxu0
  %v364 = vadd.f32 %v53, %v363
  %v365 = vpop.f32.mrb[0].mxu0
  %366 = vmatprep.mubr.f32.mxu0 0.0
  %367 = vmatmul.mubr.f32.gmra.mrb[0].mxu0 %v147
  %v368 = vpop.f32.mrb[0].mxu0
  %v369 = vadd.f32 %v53, %v368
  %v370 = vpop.f32.mrb[0].mxu0
  %371 = vmatprep.mubr.f32.mxu0 0.0
  %372 = vmatmul.mubr.f32.gmra.mrb[0].mxu0 %v150
  %v373 = vpop.f32.mrb[0].mxu0
  %v374 = vadd.f32 %v53, %v373
  %v375 = vpop.f32.mrb[0].mxu0
  %376 = vdwg.mxu0
  %v377 = vmax.f32 %v219, 0.0
  %v378 = vmax.f32 %v224, 0.0
  %v379 = vmax.f32 %v229, 0.0
  %v380 = vmax.f32 %v234, 0.0
  %v381 = vmax.f32 %v239, 0.0
  %v382 = vmax.f32 %v244, 0.0
  %v383 = vmax.f32 %v249, 0.0
  %v384 = vmax.f32 %v254, 0.0
  %v385 = vmax.f32 %v259, 0.0
  %v386 = vmax.f32 %v264, 0.0
  %v387 = vmax.f32 %v269, 0.0
  %v388 = vmax.f32 %v274, 0.0
  %v389 = vmax.f32 %v279, 0.0
  %v390 = vmax.f32 %v284, 0.0
  %v391 = vmax.f32 %v289, 0.0
  %v392 = vmax.f32 %v294, 0.0
  %v393 = vmax.f32 %v299, 0.0
  %v394 = vmax.f32 %v304, 0.0
  %v395 = vmax.f32 %v309, 0.0
  %v396 = vmax.f32 %v314, 0.0
  %v397 = vmax.f32 %v319, 0.0
  %v398 = vmax.f32 %v324, 0.0
  %v399 = vmax.f32 %v329, 0.0
  %v400 = vmax.f32 %v334, 0.0
  %v401 = vmax.f32 %v339, 0.0
  %v402 = vmax.f32 %v344, 0.0
  %v403 = vmax.f32 %v349, 0.0
  %v404 = vmax.f32 %v354, 0.0
  %v405 = vmax.f32 %v359, 0.0
  %v406 = vmax.f32 %v364, 0.0
  %v407 = vmax.f32 %v369, 0.0
  %v408 = vmax.f32 %v374, 0.0
  %409 = vst [vmem:[%s3] sm:$0xff] %v377
  %410 = vst [vmem:[%s3 + $0x8] sm:$0xff] %v378
  %411 = vst [vmem:[%s3 + $0x10] sm:$0xff] %v379
  %412 = vst [vmem:[%s3 + $0x18] sm:$0xff] %v380
  %413 = vst [vmem:[%s3 + $0x20] sm:$0xff] %v381
  %414 = vst [vmem:[%s3 + $0x28] sm:$0xff] %v382
  %415 = vst [vmem:[%s3 + $0x30] sm:$0xff] %v383
  %416 = vst [vmem:[%s3 + $0x38] sm:$0xff] %v384
  %417 = vst [vmem:[%s3 + $0x40] sm:$0xff] %v385
  %418 = vst [vmem:[%s3 + $0x48] sm:$0xff] %v386
  %419 = vst [vmem:[%s3 + $0x50] sm:$0xff] %v387
  %420 = vst [vmem:[%s3 + $0x58] sm:$0xff] %v388
  %421 = vst [vmem:[%s3 + $0x60] sm:$0xff] %v389
  %422 = vst [vmem:[%s3 + $0x68] sm:$0xff] %v390
  %423 = vst [vmem:[%s3 + $0x70] sm:$0xff] %v391
  %424 = vst [vmem:[%s3 + $0x78] sm:$0xff] %v392
  %425 = vst [vmem:[%s3 + $0x80] sm:$0xff] %v393
  %426 = vst [vmem:[%s3 + $0x88] sm:$0xff] %v394
  %427 = vst [vmem:[%s3 + $0x90] sm:$0xff] %v395
  %428 = vst [vmem:[%s3 + $0x98] sm:$0xff] %v396
  %429 = vst [vmem:[%s3 + $0xa0] sm:$0xff] %v397
  %430 = vst [vmem:[%s3 + $0xa8] sm:$0xff] %v398
  %431 = vst [vmem:[%s3 + $0xb0] sm:$0xff] %v399
  %432 = vst [vmem:[%s3 + $0xb8] sm:$0xff] %v400
  %433 = vst [vmem:[%s3 + $0xc0] sm:$0xff] %v401
  %434 = vst [vmem:[%s3 + $0xc8] sm:$0xff] %v402
  %435 = vst [vmem:[%s3 + $0xd0] sm:$0xff] %v403
  %436 = vst [vmem:[%s3 + $0xd8] sm:$0xff] %v404
  %437 = vst [vmem:[%s3 + $0xe0] sm:$0xff] %v405
  %438 = vst [vmem:[%s3 + $0xe8] sm:$0xff] %v406
  %439 = vst [vmem:[%s3 + $0xf0] sm:$0xff] %v407
  %440 = vst [vmem:[%s3 + $0xf8] sm:$0xff] %v408
  // Predicated region
  $region14: #{down_wt.1} parent=0 // pred_check
    _
  $region15: #{down_wt.1} parent=0 // pred_check_branch
    %442 = sbr.rel (0) target = $region17
  $region16: #{down_wt.1} parent=0 // pred_region
    _
  $region17: #{down_wt.1} parent=0 // pred_fallthru
    _
  // Predicated region
  $region18: #{down_wt.1} parent=0 // pred_check
    _
  $region19: #{down_wt.1} parent=0 // pred_check_branch
    %444 = sbr.rel (0) target = $region21
  $region20: #{down_wt.1} parent=0 // pred_region
    _
  $region21: #{down_wt.1} parent=0 // pred_fallthru
    _

</llo_original>
